<compile_context>
chip_gen: v7x
topology: tpu7x:2x2x1
jax: 0.10.0
libtpu: 0.0.40
codegen_flags: <defaults>
</compile_context>

<pallas_src>
import jax
import jax.numpy as jnp
from jax.experimental import pallas as pl
from jax.experimental.pallas import tpu as pltpu


def _round_up(x, m):
    return (x + m - 1) // m * m


def _cdiv(a, b):
    return (a + b - 1) // b


def _critic_fused_kernel(ctx_ref, w_ref, b_ref, vg_ref, vp_ref):
    # One fused MXU matmul (f32 accumulation) + bias add; split the narrow
    # column groups in VMEM and store each head unpadded.
    acc = (
        jnp.dot(ctx_ref[...], w_ref[...], preferred_element_type=jnp.float32)
        + b_ref[...]
    )
    g = vg_ref.shape[-1]
    vg_ref[...] = acc[:, :g].astype(vg_ref.dtype)
    vp_ref[...] = acc[:, g:].astype(vp_ref.dtype)


def pack_critic_params(w_goal, b_goal, w_pay, b_pay, *, compute_dtype=jnp.float32):
    """Pack the two Linear heads once (call at init time, NOT per forward).

    w_goal: [C, G], w_pay: [C, P]  ->  w_fused: [C, G+P] (compute_dtype)
    b_goal: [G],    b_pay: [P]     ->  b_fused: [1, G+P] (f32, added post-acc)
    """
    G = w_goal.shape[1]
    P = w_pay.shape[1]
    w_fused = jnp.concatenate(
        [w_goal.astype(compute_dtype), w_pay.astype(compute_dtype)], axis=1
    )
    b_fused = jnp.concatenate(
        [b_goal.astype(jnp.float32), b_pay.astype(jnp.float32)]
    ).reshape(1, G + P)
    return w_fused, b_fused, G, P


def critic_vgvc_forward(context, w_fused, b_fused, goal_dim, pay_dim, *, tile_b=2048):
    """context: [B, C]; packed params from pack_critic_params.

    Returns (value [B, goal_dim], value_pay [B, pay_dim]) matching
        value     = context @ w_goal + b_goal
        value_pay = context @ w_pay  + b_pay
    """
    B, C = context.shape
    G, P = goal_dim, pay_dim
    N = G + P
    itemsize = jnp.dtype(w_fused.dtype).itemsize

    # Context streams in the weights' compute dtype (bf16 path halves HBM read).
    ctx = context.astype(w_fused.dtype)

    # --- Pick the batch tile. ---
    B8 = _round_up(B, 8)
    TB = min(_round_up(max(tile_b, 8), 8), B8)
    # Keep the double-buffered working set under ~24 MiB (v7x scoped VMEM safe).
    vmem_budget = 24 * 1024 * 1024
    while TB > 8 and (2 * TB * (C + N) * itemsize + C * N * itemsize) > vmem_budget:
        TB = _round_up(TB // 2, 8)
    # Ensure >=2 grid steps on large batches so v7x's two TCs can split the
    # "parallel" axis (negligible cost on single-TC v5e/v6e).
    if _cdiv(B, TB) < 2 and B8 >= 1024:
        TB = _round_up(_cdiv(B8, 2), 8)

    grid = (_cdiv(B, TB),)

    out_bytes = B * N * 4
    in_bytes = B * C * itemsize + C * N * itemsize + N * 4

    value, value_pay = pl.pallas_call(
        _critic_fused_kernel,
        out_shape=(
            jax.ShapeDtypeStruct((B, G), jnp.float32),
            jax.ShapeDtypeStruct((B, P), jnp.float32),
        ),
        grid=grid,
        in_specs=[
            # Context streams over the batch grid (double-buffered by Pallas).
            pl.BlockSpec((TB, C), lambda i: (i, 0)),
            # Fused weight / bias: constant index_map -> resident in VMEM.
            pl.BlockSpec((C, N), lambda i: (0, 0)),
            pl.BlockSpec((1, N), lambda i: (0, 0)),
        ],
        out_specs=(
            pl.BlockSpec((TB, G), lambda i: (i, 0)),
            pl.BlockSpec((TB, P), lambda i: (i, 0)),
        ),
        compiler_params=pltpu.CompilerParams(
            dimension_semantics=("parallel",),
        ),
        cost_estimate=pl.CostEstimate(
            flops=2 * B * C * N,
            transcendentals=0,
            bytes_accessed=in_bytes + out_bytes,
        ),
    )(ctx, w_fused, b_fused)

    return value, value_pay


def init_params(key, context_dim, goal_dim, pay_dim):
    """Deterministic synthetic init matching nn.Linear parameter shapes.

    PyTorch stores Linear weight as [out, in]; we keep the transposed [in, out]
    layout so the kernel can matmul directly.
    """
    k1, k2, k3, k4 = jax.random.split(key, 4)
    scale = 1.0 / jnp.sqrt(context_dim)
    w_goal = jax.random.uniform(
        k1, (context_dim, goal_dim), jnp.float32, -scale, scale
    )
    b_goal = jax.random.uniform(k2, (goal_dim,), jnp.float32, -scale, scale)
    w_pay = jax.random.uniform(
        k3, (context_dim, pay_dim), jnp.float32, -scale, scale
    )
    b_pay = jax.random.uniform(k4, (pay_dim,), jnp.float32, -scale, scale)
    return w_goal, b_goal, w_pay, b_pay


if __name__ == "__main__":
    B, context_dim, goal_dim, pay_dim = 2, 32, 8, 4

    key = jax.random.PRNGKey(0)
    k_ctx, k_ctx2, k_params = jax.random.split(key, 3)
    context = jax.random.normal(k_ctx, (B, context_dim), dtype=jnp.float32)
    w_goal, b_goal, w_pay, b_pay = init_params(
        k_params, context_dim, goal_dim, pay_dim
    )

    # --- f32 path (exact vs reference) ---
    w_fused, b_fused, G, P = pack_critic_params(w_goal, b_goal, w_pay, b_pay)
    value, value_pay = critic_vgvc_forward(context, w_fused, b_fused, G, P)
    jax.block_until_ready((value, value_pay))

    ref_value = context @ w_goal + b_goal
    ref_value_pay = context @ w_pay + b_pay
    assert value.shape == (B, goal_dim) and value_pay.shape == (B, pay_dim)
    assert jnp.allclose(value, ref_value, atol=1e-5, rtol=1e-5)
    assert jnp.allclose(value_pay, ref_value_pay, atol=1e-5, rtol=1e-5)

    # --- non-multiple-of-8 batch exercises the remainder-block path ---
    B2 = 37
    context2 = jax.random.normal(k_ctx2, (B2, context_dim), dtype=jnp.float32)
    v2, vp2 = critic_vgvc_forward(context2, w_fused, b_fused, G, P)
    jax.block_until_ready((v2, vp2))
    assert jnp.allclose(v2, context2 @ w_goal + b_goal, atol=1e-5, rtol=1e-5)
    assert jnp.allclose(vp2, context2 @ w_pay + b_pay, atol=1e-5, rtol=1e-5)

    # --- bf16 compute path (v6e/v7x HBM-saving variant), looser tolerance ---
    w_bf, b_bf, _, _ = pack_critic_params(
        w_goal, b_goal, w_pay, b_pay, compute_dtype=jnp.bfloat16
    )
    v_bf, vp_bf = critic_vgvc_forward(context, w_bf, b_bf, G, P)
    jax.block_until_ready((v_bf, vp_bf))
    assert jnp.allclose(v_bf, ref_value, atol=5e-2, rtol=5e-2)
    assert jnp.allclose(vp_bf, ref_value_pay, atol=5e-2, rtol=5e-2)

    print("KERNEL_OK")
</pallas_src>

<mosaic_0001>
module attributes {stable_mosaic.version = 11 : i64} {
  func.func @_critic_fused_kernel(%arg0: i32, %arg1: memref<8x32xf32, #tpu.memory_space<vmem>>, %arg2: memref<32x12xf32, #tpu.memory_space<vmem>>, %arg3: memref<1x12xf32, #tpu.memory_space<vmem>>, %arg4: memref<8x8xf32, #tpu.memory_space<vmem>>, %arg5: memref<8x4xf32, #tpu.memory_space<vmem>>) attributes {dimension_semantics = [#tpu.dimension_semantics<parallel>], iteration_bounds = array<i64: 1>, scalar_prefetch = 0 : i64, scratch_operands = 0 : i64, tpu.core_type = #tpu.core_type<tc>, window_params = [{transform_indices = @transform_0, window_bounds = array<i64: 8, 32>}, {pipeline_mode = #tpu.pipeline_mode<synchronous>, transform_indices = @transform_1, window_bounds = array<i64: 32, 12>}, {pipeline_mode = #tpu.pipeline_mode<synchronous>, transform_indices = @transform_2, window_bounds = array<i64: 1, 12>}, {transform_indices = @transform_3, window_bounds = array<i64: 8, 8>}, {transform_indices = @transform_4, window_bounds = array<i64: 8, 4>}]} {
    %c0 = arith.constant 0 : index
    %c0_0 = arith.constant 0 : index
    %0 = vector.load %arg1[%c0, %c0_0] : memref<8x32xf32, #tpu.memory_space<vmem>>, vector<8x32xf32>
    %c0_1 = arith.constant 0 : index
    %c0_2 = arith.constant 0 : index
    %1 = vector.load %arg2[%c0_1, %c0_2] : memref<32x12xf32, #tpu.memory_space<vmem>>, vector<32x12xf32>
    %cst = arith.constant dense<0.000000e+00> : vector<8x12xf32>
    %2 = tpu.matmul %0, %1, %cst {dimension_numbers = #tpu.dot_dimension_numbers<[1], [0], [0], [1], [0, 0, 1, 1], [], []>} : vector<8x32xf32>, vector<32x12xf32>, vector<8x12xf32> -> vector<8x12xf32>
    %c0_3 = arith.constant 0 : index
    %c0_4 = arith.constant 0 : index
    %3 = vector.load %arg3[%c0_3, %c0_4] : memref<1x12xf32, #tpu.memory_space<vmem>>, vector<1x12xf32>
    %4 = vector.broadcast %3 : vector<1x12xf32> to vector<8x12xf32>
    %5 = arith.addf %2, %4 : vector<8x12xf32>
    %6 = vector.extract_strided_slice %5 {offsets = [0, 0], sizes = [8, 8], strides = [1, 1]} : vector<8x12xf32> to vector<8x8xf32>
    %c0_5 = arith.constant 0 : index
    %c0_6 = arith.constant 0 : index
    %7 = vector.load %arg4[%c0_5, %c0_6] : memref<8x8xf32, #tpu.memory_space<vmem>>, vector<8x8xf32>
    tpu.vector_store %arg4[%c0_5, %c0_6], %6 {strides = array<i32>} : memref<8x8xf32, #tpu.memory_space<vmem>>, vector<8x8xf32>,
    %8 = vector.extract_strided_slice %5 {offsets = [0, 8], sizes = [8, 4], strides = [1, 1]} : vector<8x12xf32> to vector<8x4xf32>
    %c0_7 = arith.constant 0 : index
    %c0_8 = arith.constant 0 : index
    %9 = vector.load %arg5[%c0_7, %c0_8] : memref<8x4xf32, #tpu.memory_space<vmem>>, vector<8x4xf32>
    tpu.vector_store %arg5[%c0_7, %c0_8], %8 {strides = array<i32>} : memref<8x4xf32, #tpu.memory_space<vmem>>, vector<8x4xf32>,
    return
  }
  func.func @transform_0(%arg0: i32) -> (i32, i32) {
    %c0_i32 = arith.constant 0 : i32
    %c0_i32_0 = arith.constant 0 : i32
    return %arg0, %c0_i32 : i32, i32
  }
  func.func @transform_1(%arg0: i32) -> (i32, i32) {
    %c0_i32 = arith.constant 0 : i32
    %c0_i32_0 = arith.constant 0 : i32
    %c0_i32_1 = arith.constant 0 : i32
    return %c0_i32, %c0_i32_0 : i32, i32
  }
  func.func @transform_2(%arg0: i32) -> (i32, i32) {
    %c0_i32 = arith.constant 0 : i32
    %c0_i32_0 = arith.constant 0 : i32
    %c0_i32_1 = arith.constant 0 : i32
    return %c0_i32, %c0_i32_0 : i32, i32
  }
  func.func @transform_3(%arg0: i32) -> (i32, i32) {
    %c0_i32 = arith.constant 0 : i32
    %c0_i32_0 = arith.constant 0 : i32
    return %arg0, %c0_i32 : i32, i32
  }
  func.func @transform_4(%arg0: i32) -> (i32, i32) {
    %c0_i32 = arith.constant 0 : i32
    %c0_i32_0 = arith.constant 0 : i32
    return %arg0, %c0_i32 : i32, i32
  }
}

</mosaic_0001>

<llo_original>
// kernel: tpu_custom_call.1
$region0: #{tpu_custom_call.1}
  #allocation0 [shape = 'u32[]', space=smem, size = 0x4, offset = 0x4, fixed_abs, tag = 'smem constant byte address 0x4 - core index']
  #allocation1 [shape = 'u32[144,128]{1,0:T(1,128)}', space=vmem, size = 0x12000, scoped, tag = 'internal scratch']
  %s0 = inlined_call_operand.vmem [shape: f32[2,32], index: 0, kind: input, shape index: {}]
  %s1 = inlined_call_operand.vmem [shape: f32[32,12], index: 1, kind: input, shape index: {}]
  %s2 = inlined_call_operand.vmem [shape: f32[1,12], index: 2, kind: input, shape index: {}]
  %s3 = inlined_call_operand.hbm [shape: f32[2,8], index: 3, kind: output, shape index: {0}]
  %s4 = inlined_call_operand.hbm [shape: f32[2,4], index: 4, kind: output, shape index: {1}]
  %5 = xla_tuple %s3, %s4
  %s6 = sld [smem:[#allocation0]]
  $region30: #{tpu_custom_call.1} parent=0
    _
  %s8 = ssub.s32 1, %s6
  %s9 = scalar_select 0, %s8, %s6
  $region1: #{tpu_custom_call.1} parent=0
    #allocation2 [shape = 'u8[4096]{0}', space=vmem, size = 0x1000, scoped, tag = 'output window, operand 0, single buffered']
    #allocation3 [shape = 's32[1]{0}', space=sflag, size = 0x4, scoped, tag = 'scoped memory for tpu_custom_call.1']
    #allocation4 [shape = 'u8[4096]{0}', space=vmem, size = 0x1000, scoped, tag = 'output window, operand 1, single buffered']
    #allocation5 [shape = 's32[1]{0}', space=sflag, size = 0x4, scoped, tag = 'scoped memory for tpu_custom_call.1']
    %10 = vsyncpa [#allocation3], 0
    %11 = vsyncpa [#allocation5], 0
    // Predicated region
    $region2: #{tpu_custom_call.1} parent=1 // pred_check
      _
    $region3: #{tpu_custom_call.1} parent=1 // pred_check_branch
      %13 = sbr.rel (0) target = $region5
    $region4: #{tpu_custom_call.1} parent=1 // pred_region
      _
    $region5: #{tpu_custom_call.1} parent=1 // pred_fallthru
      _
    // Predicated region
    $region6: #{tpu_custom_call.1} parent=1 // pred_check
      _
    $region7: #{tpu_custom_call.1} parent=1 // pred_check_branch
      %15 = sbr.rel (0) target = $region9
    $region8: #{tpu_custom_call.1} parent=1 // pred_region
      _
    $region9: #{tpu_custom_call.1} parent=1 // pred_fallthru
      _
    // Predicated region
    $region10: #{tpu_custom_call.1} parent=1 // pred_check
      _
    $region11: #{tpu_custom_call.1} parent=1 // pred_check_branch
      %17 = sbr.rel (0) target = $region13
    $region12: #{tpu_custom_call.1} parent=1 // pred_region
      _
    $region13: #{tpu_custom_call.1} parent=1 // pred_fallthru
      _
    %v18 = vld [vmem:[%s0] sm:$0xff]
    %v19 = vld [vmem:[%s1] sm:$0xff]
    %v20 = vld [vmem:[%s1 + $0x8] sm:$0xff]
    %v21 = vld [vmem:[%s1 + $0x10] sm:$0xff]
    %v22 = vld [vmem:[%s1 + $0x18] sm:$0xff]
    %v23 = vld [vmem:[%s2] sm:$0x1]
    %v25 = vlaneseq
    %v26 = vshrl.u32 %v25, 7
    %v27 = vsub.s32 0, %v26
    %v28 = vrot.slane %v23, %v27
    %vm30 = vcmask 261120
    %v32 = vsel %vm30, %v18, 0
    %34 = vmatprep.subr.mxu0 0.0
    %35 = vmatpush1.msra.mxu0 %v19
    %36 = vmatprep.subr.mxu0 0.0
    %37 = vmatpush1.msra.mxu0 %v20
    %38 = vmatprep.subr.mxu0 0.0
    %39 = vmatpush1.msra.mxu0 %v21
    %40 = vmatprep.subr.mxu0 0.0
    %41 = vmatpush1.msra.mxu0 %v22
    %42 = vmatprep.subr.mxu0 0.0
    %43 = vmatpush1.msra.mxu0 0.0
    %44 = vmatprep.subr.mxu0 0.0
    %45 = vmatpush1.msra.mxu0 0.0
    %46 = vmatprep.subr.mxu0 0.0
    %47 = vmatpush1.msra.mxu0 0.0
    %48 = vmatprep.subr.mxu0 0.0
    %49 = vmatpush1.msra.mxu0 0.0
    %50 = vmatprep.subr.mxu0 0.0
    %51 = vmatpush1.msra.mxu0 0.0
    %52 = vmatprep.subr.mxu0 0.0
    %53 = vmatpush1.msra.mxu0 0.0
    %54 = vmatprep.subr.mxu0 0.0
    %55 = vmatpush1.msra.mxu0 0.0
    %56 = vmatprep.subr.mxu0 0.0
    %57 = vmatpush1.msra.mxu0 0.0
    %58 = vmatprep.subr.mxu0 0.0
    %59 = vmatpush1.msra.mxu0 0.0
    %60 = vmatprep.subr.mxu0 0.0
    %61 = vmatpush1.msra.mxu0 0.0
    %62 = vmatprep.subr.mxu0 0.0
    %63 = vmatpush1.msra.mxu0 0.0
    %64 = vmatprep.subr.mxu0 0.0
    %65 = vmatpush1.msra.mxu0 0.0
    %66 = vmatprep.subr.mxu0 0.0
    %67 = vmatpush1.msra.mxu0 0.0
    %68 = vmatprep.subr.mxu0 0.0
    %69 = vmatpush1.msra.mxu0 0.0
    %70 = vmatprep.subr.mxu0 0.0
    %71 = vmatpush1.msra.mxu0 0.0
    %72 = vmatprep.subr.mxu0 0.0
    %73 = vmatpush1.msra.mxu0 0.0
    %74 = vmatprep.subr.mxu0 0.0
    %75 = vmatpush1.msra.mxu0 0.0
    %76 = vmatprep.subr.mxu0 0.0
    %77 = vmatpush1.msra.mxu0 0.0
    %78 = vmatprep.subr.mxu0 0.0
    %79 = vmatpush1.msra.mxu0 0.0
    %80 = vmatprep.subr.mxu0 0.0
    %81 = vmatpush1.msra.mxu0 0.0
    %82 = vmatprep.subr.mxu0 0.0
    %83 = vmatpush1.msra.mxu0 0.0
    %84 = vmatprep.subr.mxu0 0.0
    %85 = vmatpush1.msra.mxu0 0.0
    %86 = vmatprep.subr.mxu0 0.0
    %87 = vmatpush1.msra.mxu0 0.0
    %88 = vmatprep.subr.mxu0 0.0
    %89 = vmatpush1.msra.mxu0 0.0
    %90 = vmatprep.subr.mxu0 0.0
    %91 = vmatpush1.msra.mxu0 0.0
    %92 = vmatprep.subr.mxu0 0.0
    %93 = vmatpush1.msra.mxu0 0.0
    %94 = vmatprep.subr.mxu0 0.0
    %95 = vmatpush1.msra.mxu0 0.0
    %96 = vmatprep.subr.mxu0 0.0
    %97 = vmatpush1.msra.mxu0 0.0
    %98 = vmatprep.mubr.f32.mxu0 0.0
    %99 = vmatmul.mubr.f32.gmra.mrb[0].mxu0 %v32
    %v100 = vpop.f32.mrb[0].mxu0
    %v101 = vadd.f32 %v28, %v100
    %v102 = vpop.f32.mrb[0].mxu0
    %103 = vdwg.mxu0
    %vm104 = vcmask 64512
    %105 = vst.msk [vmem:[#allocation2] sm:$0xff] %vm104, %v101
    %107 = vrot.lane.b32.xlu0 %v101, 120
    %v108 = vpop.permute.xlu0 %107
    %vm110 = vcmask 31744
    %111 = vst.msk [vmem:[#allocation4] sm:$0xff] %vm110, %v108
    // Predicated region
    $region14: #{tpu_custom_call.1} parent=1 // pred_check
      _
    $region15: #{tpu_custom_call.1} parent=1 // pred_check_branch
      %113 = sbr.rel (0) target = $region17
    $region16: #{tpu_custom_call.1} parent=1 // pred_region
      %s115 = ssub.s32 128, 32
      %116 = vsyncadd [#allocation3], %s115
      %s117 = sshll.u32 [#allocation2], 4
      %s118 = int_to_ptr.vmem [resolvable:$true] %s117
      %123 = dma.vmem_to_hbm [thread:$0]  %s118, 32, %s3, [#allocation3], 32, 32, 2
    $region17: #{tpu_custom_call.1} parent=1 // pred_fallthru
      _
    // Predicated region
    $region18: #{tpu_custom_call.1} parent=1 // pred_check
      _
    $region19: #{tpu_custom_call.1} parent=1 // pred_check_branch
      %125 = sbr.rel (0) target = $region21
    $region20: #{tpu_custom_call.1} parent=1 // pred_region
      %s127 = ssub.s32 128, 32
      %128 = vsyncadd [#allocation5], %s127
      %s129 = sshll.u32 [#allocation4], 4
      %s130 = int_to_ptr.vmem [resolvable:$true] %s129
      %135 = dma.vmem_to_hbm [thread:$0]  %s130, 32, %s4, [#allocation5], 32, 32, 2
    $region21: #{tpu_custom_call.1} parent=1 // pred_fallthru
      _
    // Predicated region
    $region22: #{tpu_custom_call.1} parent=1 // pred_check
      _
    $region23: #{tpu_custom_call.1} parent=1 // pred_check_branch
      %137 = sbr.rel (0) target = $region25
    $region24: #{tpu_custom_call.1} parent=1 // pred_region
      %138 = dma.done [#allocation3], 128
    $region25: #{tpu_custom_call.1} parent=1 // pred_fallthru
      _
    // Predicated region
    $region26: #{tpu_custom_call.1} parent=1 // pred_check
      _
    $region27: #{tpu_custom_call.1} parent=1 // pred_check_branch
      %140 = sbr.rel (0) target = $region29
    $region28: #{tpu_custom_call.1} parent=1 // pred_region
      %141 = dma.done [#allocation5], 128
    $region29: #{tpu_custom_call.1} parent=1 // pred_fallthru
      _
    %142 = vsyncpa [#allocation3], 1
    %143 = vsyncpa [#allocation5], 1

</llo_original>
